<compile_context>
chip_gen: v6e
topology: v6e:2x2x1
jax: 0.10.0
libtpu: 0.0.40
codegen_flags: <defaults>
</compile_context>

<pallas_src>
import functools

import jax
import jax.numpy as jnp
from jax.experimental import pallas as pl
from jax.experimental.pallas import tpu as pltpu


def _round_up(n, m):
    return ((n + m - 1) // m) * m


def _pad2(a, rows, cols):
    return jnp.pad(a, ((0, rows - a.shape[0]), (0, cols - a.shape[1])))


def _encoder_kernel(n_mlp, dx_p, hid_p, head_w, *refs):
    """Fused Encoder forward on one batch tile.

    refs = (x, c, w_in, [w_extra...], w_heads, biases, out)
      x       : (TB, dx_p)                 zero-padded input features
      c       : (TB, dc_p)                 zero-padded attribute features
      w_in    : (dx_p + dc_p, hid_p[0])    first-layer weight, row-split x|c
      w_extra : (hid_p[i-1], hid_p[i])     remaining MLP layers (if any)
      w_heads : (hid_p[-1], head_w)        [W_means | W_logvar], lane-packed
      biases  : (rows_p, max_w)            row i = bias of layer i (head last)
      out     : (TB, head_w)               [means | log_vars], lane-dense
    """
    x_ref, c_ref, w_in_ref = refs[0], refs[1], refs[2]
    extra_refs = refs[3:3 + n_mlp - 1]
    w_heads_ref = refs[3 + n_mlp - 1]
    b_ref = refs[3 + n_mlp]
    out_ref = refs[3 + n_mlp + 1]

    h0 = hid_p[0]
    # First layer: split matmul replaces torch.cat((x, c), -1) @ W0.
    h = (
        jnp.dot(x_ref[...], w_in_ref[0:dx_p, :], preferred_element_type=jnp.float32)
        + jnp.dot(c_ref[...], w_in_ref[dx_p:, :], preferred_element_type=jnp.float32)
        + b_ref[0:1, 0:h0]
    )
    h = jnp.maximum(h, 0.0)

    # Remaining MLP layers (Linear + ReLU).
    for i, w_ref in enumerate(extra_refs):
        hi = hid_p[i + 1]
        h = (
            jnp.dot(h, w_ref[...], preferred_element_type=jnp.float32)
            + b_ref[i + 1:i + 2, 0:hi]
        )
        h = jnp.maximum(h, 0.0)

    # Both heads in one matmul; single lane-dense store.
    out_ref[...] = (
        jnp.dot(h, w_heads_ref[...], preferred_element_type=jnp.float32)
        + b_ref[n_mlp:n_mlp + 1, 0:head_w]
    )


def encoder_forward(x, c, mlp_params, means_params, logvar_params):
    """mlp_params: list of (W[in,out], b[out]); heads: (W[in,out], b[out])."""
    LANE, SUB = 128, 8
    batch, dx = x.shape
    dc = c.shape[1]
    latent = means_params[0].shape[1]
    n_mlp = len(mlp_params)

    dx_p = _round_up(dx, LANE)
    dc_p = _round_up(dc, LANE)
    hid = [w.shape[1] for w, _ in mlp_params]
    hid_p = [_round_up(h, LANE) for h in hid]
    lat_p = _round_up(latent, LANE)
    head_w = 2 * lat_p

    # Batch tiling: block multiple of 8 (f32 sublane), capped at 512 rows.
    tb = min(_round_up(batch, SUB), 512)
    batch_p = _round_up(batch, tb)
    grid = (batch_p // tb,)

    x_p = jnp.pad(x.astype(jnp.float32), ((0, batch_p - batch), (0, dx_p - dx)))
    c_p = jnp.pad(c.astype(jnp.float32), ((0, batch_p - batch), (0, dc_p - dc)))

    # Pack first-layer weight: rows [0:dx_p] multiply x, rows [dx_p:] multiply c.
    w0, _ = mlp_params[0]
    w_in = jnp.concatenate(
        [_pad2(w0[:dx, :], dx_p, hid_p[0]), _pad2(w0[dx:, :], dc_p, hid_p[0])],
        axis=0,
    )

    extra_ws = [
        _pad2(mlp_params[i][0], hid_p[i - 1], hid_p[i]) for i in range(1, n_mlp)
    ]

    # Pack both heads into one weight: cols [0:lat_p]=means, [lat_p:]=logvar.
    (wm, bm), (wv, bv) = means_params, logvar_params
    w_heads = jnp.concatenate(
        [_pad2(wm, hid_p[-1], lat_p), _pad2(wv, hid_p[-1], lat_p)], axis=1
    )

    # Pack every bias into a single buffer (one DMA instead of n_mlp + 2).
    max_w = max(hid_p + [head_w])
    rows_p = _round_up(n_mlp + 1, SUB)
    b_buf = jnp.zeros((rows_p, max_w), jnp.float32)
    for i, (_, b) in enumerate(mlp_params):
        b_buf = b_buf.at[i, :hid[i]].set(b)
    b_buf = b_buf.at[n_mlp, :latent].set(bm)
    b_buf = b_buf.at[n_mlp, lat_p:lat_p + latent].set(bv)

    flat_args = [x_p, c_p, w_in, *extra_ws, w_heads, b_buf]

    in_specs = [
        pl.BlockSpec((tb, dx_p), lambda i: (i, 0)),
        pl.BlockSpec((tb, dc_p), lambda i: (i, 0)),
        pl.BlockSpec(w_in.shape, lambda i: (0, 0)),
    ]
    for w in extra_ws:
        in_specs.append(pl.BlockSpec(w.shape, lambda i: (0, 0)))
    in_specs += [
        pl.BlockSpec(w_heads.shape, lambda i: (0, 0)),
        pl.BlockSpec(b_buf.shape, lambda i: (0, 0)),
    ]
    out_specs = pl.BlockSpec((tb, head_w), lambda i: (i, 0))
    out_shape = jax.ShapeDtypeStruct((batch_p, head_w), jnp.float32)

    flops = 2 * batch_p * (
        dx_p * hid_p[0]
        + dc_p * hid_p[0]
        + sum(hid_p[i - 1] * hid_p[i] for i in range(1, n_mlp))
        + hid_p[-1] * head_w
    )
    bytes_accessed = 4 * (
        x_p.size + c_p.size + w_in.size + sum(int(w.size) for w in extra_ws)
        + w_heads.size + b_buf.size + batch_p * head_w
    )
    cost = pl.CostEstimate(
        flops=int(flops), transcendentals=0, bytes_accessed=int(bytes_accessed)
    )

    out = pl.pallas_call(
        functools.partial(_encoder_kernel, n_mlp, dx_p, tuple(hid_p), head_w),
        out_shape=out_shape,
        grid=grid,
        in_specs=in_specs,
        out_specs=out_specs,
        compiler_params=pltpu.CompilerParams(dimension_semantics=("parallel",)),
        cost_estimate=cost,
    )(*flat_args)

    means = out[:batch, :latent]
    log_vars = out[:batch, lat_p:lat_p + latent]
    return means, log_vars


def _init_linear(key, in_size, out_size):
    """Deterministic init mimicking nn.Linear (uniform +/- 1/sqrt(in))."""
    kw, kb = jax.random.split(key)
    bound = 1.0 / (in_size ** 0.5)
    w = jax.random.uniform(kw, (in_size, out_size), jnp.float32, -bound, bound)
    b = jax.random.uniform(kb, (out_size,), jnp.float32, -bound, bound)
    return w, b


def _reference_forward(x, c, mlp_params, means_params, logvar_params):
    h = jnp.concatenate([x, c], axis=-1)
    for w, b in mlp_params:
        h = jnp.maximum(h @ w + b, 0.0)
    means = h @ means_params[0] + means_params[1]
    log_vars = h @ logvar_params[0] + logvar_params[1]
    return means, log_vars


if __name__ == "__main__":
    # Encoder(layer_sizes=[32, 64], latent_size=32, attSize=16):
    #   layer_sizes[0] += attSize  => MLP: Linear(48, 64) + ReLU
    #   heads: Linear(64, 32) x 2
    layer_sizes = [32, 64]
    latent_size = 32
    att_size = 16
    batch = 8

    key = jax.random.PRNGKey(0)
    kx, kc, *kws = jax.random.split(key, 2 + len(layer_sizes) + 1)

    x = jax.random.normal(kx, (batch, layer_sizes[0]), jnp.float32)
    c = jax.random.normal(kc, (batch, att_size), jnp.float32)

    sizes = [layer_sizes[0] + att_size] + layer_sizes[1:]
    mlp_params = []
    for i, (in_s, out_s) in enumerate(zip(sizes[:-1], sizes[1:])):
        mlp_params.append(_init_linear(kws[i], in_s, out_s))
    means_params = _init_linear(kws[len(sizes) - 1], sizes[-1], latent_size)
    logvar_params = _init_linear(kws[len(sizes)], sizes[-1], latent_size)

    means, log_vars = encoder_forward(x, c, mlp_params, means_params, logvar_params)
    jax.block_until_ready((means, log_vars))

    ref_means, ref_log_vars = _reference_forward(
        x, c, mlp_params, means_params, logvar_params
    )
    assert means.shape == (batch, latent_size)
    assert log_vars.shape == (batch, latent_size)
    assert jnp.allclose(means, ref_means, atol=1e-5, rtol=1e-5)
    assert jnp.allclose(log_vars, ref_log_vars, atol=1e-5, rtol=1e-5)

    print("KERNEL_OK")
</pallas_src>

<mosaic_0001>
module attributes {stable_mosaic.version = 11 : i64} {
  func.func @_encoder_kernel(%arg0: i32, %arg1: memref<8x128xf32, #tpu.memory_space<vmem>>, %arg2: memref<8x128xf32, #tpu.memory_space<vmem>>, %arg3: memref<256x128xf32, #tpu.memory_space<vmem>>, %arg4: memref<128x256xf32, #tpu.memory_space<vmem>>, %arg5: memref<8x256xf32, #tpu.memory_space<vmem>>, %arg6: memref<8x256xf32, #tpu.memory_space<vmem>>) attributes {dimension_semantics = [#tpu.dimension_semantics<parallel>], iteration_bounds = array<i64: 1>, scalar_prefetch = 0 : i64, scratch_operands = 0 : i64, tpu.core_type = #tpu.core_type<tc>, window_params = [{transform_indices = @transform_0, window_bounds = array<i64: 8, 128>}, {transform_indices = @transform_1, window_bounds = array<i64: 8, 128>}, {pipeline_mode = #tpu.pipeline_mode<synchronous>, transform_indices = @transform_2, window_bounds = array<i64: 256, 128>}, {pipeline_mode = #tpu.pipeline_mode<synchronous>, transform_indices = @transform_3, window_bounds = array<i64: 128, 256>}, {pipeline_mode = #tpu.pipeline_mode<synchronous>, transform_indices = @transform_4, window_bounds = array<i64: 8, 256>}, {transform_indices = @transform_5, window_bounds = array<i64: 8, 256>}]} {
    %c0 = arith.constant 0 : index
    %c0_0 = arith.constant 0 : index
    %0 = vector.load %arg1[%c0, %c0_0] : memref<8x128xf32, #tpu.memory_space<vmem>>, vector<8x128xf32>
    %c0_1 = arith.constant 0 : index
    %c0_2 = arith.constant 0 : index
    %1 = vector.load %arg3[%c0_1, %c0_2] : memref<256x128xf32, #tpu.memory_space<vmem>>, vector<128x128xf32>
    %cst = arith.constant dense<0.000000e+00> : vector<8x128xf32>
    %2 = tpu.matmul %0, %1, %cst {dimension_numbers = #tpu.dot_dimension_numbers<[1], [0], [0], [1], [0, 0, 1, 1], [], []>} : vector<8x128xf32>, vector<128x128xf32>, vector<8x128xf32> -> vector<8x128xf32>
    %c0_3 = arith.constant 0 : index
    %c0_4 = arith.constant 0 : index
    %3 = vector.load %arg2[%c0_3, %c0_4] : memref<8x128xf32, #tpu.memory_space<vmem>>, vector<8x128xf32>
    %c128 = arith.constant 128 : index
    %c0_5 = arith.constant 0 : index
    %4 = vector.load %arg3[%c128, %c0_5] : memref<256x128xf32, #tpu.memory_space<vmem>>, vector<128x128xf32>
    %cst_6 = arith.constant dense<0.000000e+00> : vector<8x128xf32>
    %5 = tpu.matmul %3, %4, %cst_6 {dimension_numbers = #tpu.dot_dimension_numbers<[1], [0], [0], [1], [0, 0, 1, 1], [], []>} : vector<8x128xf32>, vector<128x128xf32>, vector<8x128xf32> -> vector<8x128xf32>
    %6 = arith.addf %2, %5 : vector<8x128xf32>
    %c0_7 = arith.constant 0 : index
    %c0_8 = arith.constant 0 : index
    %7 = vector.load %arg5[%c0_7, %c0_8] : memref<8x256xf32, #tpu.memory_space<vmem>>, vector<1x128xf32>
    %8 = vector.broadcast %7 : vector<1x128xf32> to vector<8x128xf32>
    %9 = arith.addf %6, %8 : vector<8x128xf32>
    %cst_9 = arith.constant 0.000000e+00 : f32
    %10 = vector.broadcast %cst_9 : f32 to vector<8x128xf32>
    %11 = arith.maximumf %9, %10 : vector<8x128xf32>
    %c0_10 = arith.constant 0 : index
    %c0_11 = arith.constant 0 : index
    %12 = vector.load %arg4[%c0_10, %c0_11] : memref<128x256xf32, #tpu.memory_space<vmem>>, vector<128x256xf32>
    %cst_12 = arith.constant dense<0.000000e+00> : vector<8x256xf32>
    %13 = tpu.matmul %11, %12, %cst_12 {dimension_numbers = #tpu.dot_dimension_numbers<[1], [0], [0], [1], [0, 0, 1, 1], [], []>} : vector<8x128xf32>, vector<128x256xf32>, vector<8x256xf32> -> vector<8x256xf32>
    %c1 = arith.constant 1 : index
    %c0_13 = arith.constant 0 : index
    %14 = vector.load %arg5[%c1, %c0_13] : memref<8x256xf32, #tpu.memory_space<vmem>>, vector<1x256xf32>
    %15 = vector.broadcast %14 : vector<1x256xf32> to vector<8x256xf32>
    %16 = arith.addf %13, %15 : vector<8x256xf32>
    %c0_14 = arith.constant 0 : index
    %c0_15 = arith.constant 0 : index
    %17 = vector.load %arg6[%c0_14, %c0_15] : memref<8x256xf32, #tpu.memory_space<vmem>>, vector<8x256xf32>
    tpu.vector_store %arg6[%c0_14, %c0_15], %16 {strides = array<i32>} : memref<8x256xf32, #tpu.memory_space<vmem>>, vector<8x256xf32>,
    return
  }
  func.func @transform_0(%arg0: i32) -> (i32, i32) {
    %c0_i32 = arith.constant 0 : i32
    %c0_i32_0 = arith.constant 0 : i32
    return %arg0, %c0_i32 : i32, i32
  }
  func.func @transform_1(%arg0: i32) -> (i32, i32) {
    %c0_i32 = arith.constant 0 : i32
    %c0_i32_0 = arith.constant 0 : i32
    return %arg0, %c0_i32 : i32, i32
  }
  func.func @transform_2(%arg0: i32) -> (i32, i32) {
    %c0_i32 = arith.constant 0 : i32
    %c0_i32_0 = arith.constant 0 : i32
    %c0_i32_1 = arith.constant 0 : i32
    return %c0_i32, %c0_i32_0 : i32, i32
  }
  func.func @transform_3(%arg0: i32) -> (i32, i32) {
    %c0_i32 = arith.constant 0 : i32
    %c0_i32_0 = arith.constant 0 : i32
    %c0_i32_1 = arith.constant 0 : i32
    return %c0_i32, %c0_i32_0 : i32, i32
  }
  func.func @transform_4(%arg0: i32) -> (i32, i32) {
    %c0_i32 = arith.constant 0 : i32
    %c0_i32_0 = arith.constant 0 : i32
    %c0_i32_1 = arith.constant 0 : i32
    return %c0_i32, %c0_i32_0 : i32, i32
  }
  func.func @transform_5(%arg0: i32) -> (i32, i32) {
    %c0_i32 = arith.constant 0 : i32
    %c0_i32_0 = arith.constant 0 : i32
    return %arg0, %c0_i32 : i32, i32
  }
}

</mosaic_0001>

<llo_original>
// kernel: tpu_custom_call.1
$region0: #{tpu_custom_call.1}
  #allocation0 [shape = 'u32[]', space=smem, size = 0x4, offset = 0x4, fixed_abs, tag = 'smem constant byte address 0x4 - core index']
  #allocation1 [shape = 'u32[144,128]{1,0:T(1,128)}', space=vmem, size = 0x12000, scoped, tag = 'internal scratch']
  %s0 = inlined_call_operand.hbm [shape: f32[8,128], index: 0, kind: input, shape index: {}]
  %s1 = inlined_call_operand.hbm [shape: f32[8,128], index: 1, kind: input, shape index: {}]
  %s2 = inlined_call_operand.hbm [shape: f32[256,128], index: 2, kind: input, shape index: {}]
  %s3 = inlined_call_operand.hbm [shape: f32[128,256], index: 3, kind: input, shape index: {}]
  %s4 = inlined_call_operand.hbm [shape: f32[8,256], index: 4, kind: input, shape index: {}]
  %s5 = inlined_call_operand.hbm [shape: f32[8,256], index: 5, kind: output, shape index: {}]
  %s6 = sld [smem:[#allocation0]]
  $region50: #{tpu_custom_call.1} parent=0
    _
  %s8 = ssub.s32 1, %s6
  %s9 = scalar_select 0, %s8, %s6
  $region1: #{tpu_custom_call.1} parent=0
    #allocation2 [shape = 'u8[4096]{0}', space=vmem, size = 0x1000, scoped, tag = 'input window, operand 0, single buffered']
    #allocation3 [shape = 's32[1]{0}', space=sflag, size = 0x4, scoped, tag = 'scoped memory for tpu_custom_call.1']
    #allocation4 [shape = 's32[1]{0}', space=sflag, size = 0x4, scoped, tag = 'scoped memory for tpu_custom_call.1']
    #allocation5 [shape = 'u8[4096]{0}', space=vmem, size = 0x1000, scoped, tag = 'input window, operand 1, single buffered']
    #allocation6 [shape = 's32[1]{0}', space=sflag, size = 0x4, scoped, tag = 'scoped memory for tpu_custom_call.1']
    #allocation7 [shape = 'u8[131072]{0}', space=vmem, size = 0x20000, scoped, tag = 'input window, operand 2, single buffered']
    #allocation8 [shape = 'u8[131072]{0}', space=vmem, size = 0x20000, scoped, tag = 'input window, operand 3, single buffered']
    #allocation9 [shape = 's32[1]{0}', space=sflag, size = 0x4, scoped, tag = 'scoped memory for tpu_custom_call.1']
    #allocation10 [shape = 'u8[8192]{0}', space=vmem, size = 0x2000, scoped, tag = 'input window, operand 4, single buffered']
    #allocation11 [shape = 'u8[8192]{0}', space=vmem, size = 0x2000, scoped, tag = 'output window, operand 0, single buffered']
    %10 = vsyncpa [#allocation3], 0
    %11 = vsyncpa [#allocation6], 0
    %12 = vsyncpa [#allocation9], 0
    %13 = vsyncpa [#allocation4], 0
    // Predicated region
    $region2: #{tpu_custom_call.1} parent=1 // pred_check
      _
    $region3: #{tpu_custom_call.1} parent=1 // pred_check_branch
      %15 = sbr.rel (0) target = $region5
    $region4: #{tpu_custom_call.1} parent=1 // pred_region
      %s17 = ssub.s32 128, 128
      %18 = vsyncadd [#allocation3], %s17
      %s20 = sshll.u32 [#allocation2], 4
      %s21 = int_to_ptr.vmem [resolvable:$true] %s20
      %23 = dma.hbm_to_vmem [thread:$0]  %s0, 128, %s21, [#allocation3]
    $region5: #{tpu_custom_call.1} parent=1 // pred_fallthru
      _
    // Predicated region
    $region6: #{tpu_custom_call.1} parent=1 // pred_check
      _
    $region7: #{tpu_custom_call.1} parent=1 // pred_check_branch
      %25 = sbr.rel (0) target = $region9
    $region8: #{tpu_custom_call.1} parent=1 // pred_region
      %s27 = ssub.s32 128, 128
      %28 = vsyncadd [#allocation6], %s27
      %s30 = sshll.u32 [#allocation5], 4
      %s31 = int_to_ptr.vmem [resolvable:$true] %s30
      %33 = dma.hbm_to_vmem [thread:$0]  %s1, 128, %s31, [#allocation6]
    $region9: #{tpu_custom_call.1} parent=1 // pred_fallthru
      _
    // Predicated region
    $region10: #{tpu_custom_call.1} parent=1 // pred_check
      _
    $region11: #{tpu_custom_call.1} parent=1 // pred_check_branch
      %35 = sbr.rel (0) target = $region13
    $region12: #{tpu_custom_call.1} parent=1 // pred_region
      %s37 = ssub.s32 4096, 4096
      %38 = vsyncadd [#allocation6], %s37
      %s39 = sshll.u32 [#allocation7], 4
      %s40 = int_to_ptr.vmem [resolvable:$true] %s39
      %45 = dma.hbm_to_vmem [thread:$0]  %s2, 4096, %s40, [#allocation6], 128, 128, 8
    $region13: #{tpu_custom_call.1} parent=1 // pred_fallthru
      _
    // Predicated region
    $region14: #{tpu_custom_call.1} parent=1 // pred_check
      _
    $region15: #{tpu_custom_call.1} parent=1 // pred_check_branch
      %47 = sbr.rel (0) target = $region17
    $region16: #{tpu_custom_call.1} parent=1 // pred_region
      %s49 = ssub.s32 4096, 4096
      %50 = vsyncadd [#allocation9], %s49
      %s51 = sshll.u32 [#allocation8], 4
      %s52 = int_to_ptr.vmem [resolvable:$true] %s51
      %57 = dma.hbm_to_vmem [thread:$0]  %s3, 4096, %s52, [#allocation9], 256, 256, 16
    $region17: #{tpu_custom_call.1} parent=1 // pred_fallthru
      _
    // Predicated region
    $region18: #{tpu_custom_call.1} parent=1 // pred_check
      _
    $region19: #{tpu_custom_call.1} parent=1 // pred_check_branch
      %59 = sbr.rel (0) target = $region21
    $region20: #{tpu_custom_call.1} parent=1 // pred_region
      %s61 = ssub.s32 256, 256
      %62 = vsyncadd [#allocation9], %s61
      %s64 = sshll.u32 [#allocation10], 4
      %s65 = int_to_ptr.vmem [resolvable:$true] %s64
      %67 = dma.hbm_to_vmem [thread:$0]  %s4, 256, %s65, [#allocation9]
    $region21: #{tpu_custom_call.1} parent=1 // pred_fallthru
      _
    // Predicated region
    $region22: #{tpu_custom_call.1} parent=1 // pred_check
      _
    $region23: #{tpu_custom_call.1} parent=1 // pred_check_branch
      %69 = sbr.rel (0) target = $region25
    $region24: #{tpu_custom_call.1} parent=1 // pred_region
      %70 = dma.done [#allocation3], 128
    $region25: #{tpu_custom_call.1} parent=1 // pred_fallthru
      _
    // Predicated region
    $region26: #{tpu_custom_call.1} parent=1 // pred_check
      _
    $region27: #{tpu_custom_call.1} parent=1 // pred_check_branch
      %72 = sbr.rel (0) target = $region29
    $region28: #{tpu_custom_call.1} parent=1 // pred_region
      %73 = dma.done [#allocation6], 128
    $region29: #{tpu_custom_call.1} parent=1 // pred_fallthru
      _
    // Predicated region
    $region30: #{tpu_custom_call.1} parent=1 // pred_check
      _
    $region31: #{tpu_custom_call.1} parent=1 // pred_check_branch
      %75 = sbr.rel (0) target = $region33
    $region32: #{tpu_custom_call.1} parent=1 // pred_region
      %76 = dma.done [#allocation6], 4096
    $region33: #{tpu_custom_call.1} parent=1 // pred_fallthru
      _
    // Predicated region
    $region34: #{tpu_custom_call.1} parent=1 // pred_check
      _
    $region35: #{tpu_custom_call.1} parent=1 // pred_check_branch
      %78 = sbr.rel (0) target = $region37
    $region36: #{tpu_custom_call.1} parent=1 // pred_region
      %79 = dma.done [#allocation9], 4096
    $region37: #{tpu_custom_call.1} parent=1 // pred_fallthru
      _
    // Predicated region
    $region38: #{tpu_custom_call.1} parent=1 // pred_check
      _
    $region39: #{tpu_custom_call.1} parent=1 // pred_check_branch
      %81 = sbr.rel (0) target = $region41
    $region40: #{tpu_custom_call.1} parent=1 // pred_region
      %82 = dma.done [#allocation9], 256
    $region41: #{tpu_custom_call.1} parent=1 // pred_fallthru
      _
    %v83 = vld [vmem:[#allocation2] sm:$0xff]
    %v84 = vld [vmem:[#allocation7] sm:$0xff]
    %v85 = vld [vmem:[#allocation7 + $0x8] sm:$0xff]
    %v86 = vld [vmem:[#allocation7 + $0x10] sm:$0xff]
    %v87 = vld [vmem:[#allocation7 + $0x18] sm:$0xff]
    %v88 = vld [vmem:[#allocation7 + $0x20] sm:$0xff]
    %v89 = vld [vmem:[#allocation7 + $0x28] sm:$0xff]
    %v90 = vld [vmem:[#allocation7 + $0x30] sm:$0xff]
    %v91 = vld [vmem:[#allocation7 + $0x38] sm:$0xff]
    %v92 = vld [vmem:[#allocation7 + $0x40] sm:$0xff]
    %v93 = vld [vmem:[#allocation7 + $0x48] sm:$0xff]
    %v94 = vld [vmem:[#allocation7 + $0x50] sm:$0xff]
    %v95 = vld [vmem:[#allocation7 + $0x58] sm:$0xff]
    %v96 = vld [vmem:[#allocation7 + $0x60] sm:$0xff]
    %v97 = vld [vmem:[#allocation7 + $0x68] sm:$0xff]
    %v98 = vld [vmem:[#allocation7 + $0x70] sm:$0xff]
    %v99 = vld [vmem:[#allocation7 + $0x78] sm:$0xff]
    %v100 = vld [vmem:[#allocation5] sm:$0xff]
    %v101 = vld [vmem:[#allocation7 + $0x80] sm:$0xff]
    %v102 = vld [vmem:[#allocation7 + $0x88] sm:$0xff]
    %v103 = vld [vmem:[#allocation7 + $0x90] sm:$0xff]
    %v104 = vld [vmem:[#allocation7 + $0x98] sm:$0xff]
    %v105 = vld [vmem:[#allocation7 + $0xa0] sm:$0xff]
    %v106 = vld [vmem:[#allocation7 + $0xa8] sm:$0xff]
    %v107 = vld [vmem:[#allocation7 + $0xb0] sm:$0xff]
    %v108 = vld [vmem:[#allocation7 + $0xb8] sm:$0xff]
    %v109 = vld [vmem:[#allocation7 + $0xc0] sm:$0xff]
    %v110 = vld [vmem:[#allocation7 + $0xc8] sm:$0xff]
    %v111 = vld [vmem:[#allocation7 + $0xd0] sm:$0xff]
    %v112 = vld [vmem:[#allocation7 + $0xd8] sm:$0xff]
    %v113 = vld [vmem:[#allocation7 + $0xe0] sm:$0xff]
    %v114 = vld [vmem:[#allocation7 + $0xe8] sm:$0xff]
    %v115 = vld [vmem:[#allocation7 + $0xf0] sm:$0xff]
    %v116 = vld [vmem:[#allocation7 + $0xf8] sm:$0xff]
    %117 = vmatprep.subr.mxu0 0.0
    %118 = vmatpush1.msra.mxu0 %v116
    %119 = vmatprep.subr.mxu0 0.0
    %120 = vmatpush1.msra.mxu0 %v115
    %121 = vmatprep.subr.mxu0 0.0
    %122 = vmatpush1.msra.mxu0 %v114
    %123 = vmatprep.subr.mxu0 0.0
    %124 = vmatpush1.msra.mxu0 %v113
    %125 = vmatprep.subr.mxu0 0.0
    %126 = vmatpush1.msra.mxu0 %v112
    %127 = vmatprep.subr.mxu0 0.0
    %128 = vmatpush1.msra.mxu0 %v111
    %129 = vmatprep.subr.mxu0 0.0
    %130 = vmatpush1.msra.mxu0 %v110
    %131 = vmatprep.subr.mxu0 0.0
    %132 = vmatpush1.msra.mxu0 %v109
    %133 = vmatprep.subr.mxu0 0.0
    %134 = vmatpush1.msra.mxu0 %v108
    %135 = vmatprep.subr.mxu0 0.0
    %136 = vmatpush1.msra.mxu0 %v107
    %137 = vmatprep.subr.mxu0 0.0
    %138 = vmatpush1.msra.mxu0 %v106
    %139 = vmatprep.subr.mxu0 0.0
    %140 = vmatpush1.msra.mxu0 %v105
    %141 = vmatprep.subr.mxu0 0.0
    %142 = vmatpush1.msra.mxu0 %v104
    %143 = vmatprep.subr.mxu0 0.0
    %144 = vmatpush1.msra.mxu0 %v103
    %145 = vmatprep.subr.mxu0 0.0
    %146 = vmatpush1.msra.mxu0 %v102
    %147 = vmatprep.subr.mxu0 0.0
    %148 = vmatpush1.msra.mxu0 %v101
    %149 = vmatprep.subr.mxu0 0.0
    %150 = vmatpush2.msra.mxu0 0.0
    %151 = vmatprep.subr.mxu0 0.0
    %152 = vmatpush2.msra.mxu0 0.0
    %153 = vmatprep.subr.mxu0 0.0
    %154 = vmatpush2.msra.mxu0 0.0
    %155 = vmatprep.subr.mxu0 0.0
    %156 = vmatpush2.msra.mxu0 0.0
    %157 = vmatprep.subr.mxu0 0.0
    %158 = vmatpush2.msra.mxu0 0.0
    %159 = vmatprep.subr.mxu0 0.0
    %160 = vmatpush2.msra.mxu0 0.0
    %161 = vmatprep.subr.mxu0 0.0
    %162 = vmatpush2.msra.mxu0 0.0
    %163 = vmatprep.subr.mxu0 0.0
    %164 = vmatpush2.msra.mxu0 0.0
    %165 = vmatprep.subr.mxu0 0.0
    %166 = vmatpush2.msra.mxu0 0.0
    %167 = vmatprep.subr.mxu0 0.0
    %168 = vmatpush2.msra.mxu0 0.0
    %169 = vmatprep.subr.mxu0 0.0
    %170 = vmatpush2.msra.mxu0 0.0
    %171 = vmatprep.subr.mxu0 0.0
    %172 = vmatpush2.msra.mxu0 0.0
    %173 = vmatprep.subr.mxu0 0.0
    %174 = vmatpush2.msra.mxu0 0.0
    %175 = vmatprep.subr.mxu0 0.0
    %176 = vmatpush2.msra.mxu0 0.0
    %177 = vmatprep.subr.mxu0 0.0
    %178 = vmatpush2.msra.mxu0 0.0
    %179 = vmatprep.subr.mxu0 0.0
    %180 = vmatpush2.msra.mxu0 0.0
    %181 = vmatprep.mubr.f32.mxu0 0.0
    %182 = vmatmul.mubr.f32.gmra.mxu0 %v100
    %v183 = vpop.f32.mrf.mxu0
    %v184 = vadd.f32 0.0, %v183
    %v185 = vpop.f32.mrf.mxu0
    %186 = vdwg.mxu0
    %187 = vmatprep.subr.mxu0 0.0
    %188 = vmatpush1.msra.mxu0 %v99
    %189 = vmatprep.subr.mxu0 0.0
    %190 = vmatpush1.msra.mxu0 %v98
    %191 = vmatprep.subr.mxu0 0.0
    %192 = vmatpush1.msra.mxu0 %v97
    %193 = vmatprep.subr.mxu0 0.0
    %194 = vmatpush1.msra.mxu0 %v96
    %195 = vmatprep.subr.mxu0 0.0
    %196 = vmatpush1.msra.mxu0 %v95
    %197 = vmatprep.subr.mxu0 0.0
    %198 = vmatpush1.msra.mxu0 %v94
    %199 = vmatprep.subr.mxu0 0.0
    %200 = vmatpush1.msra.mxu0 %v93
    %201 = vmatprep.subr.mxu0 0.0
    %202 = vmatpush1.msra.mxu0 %v92
    %203 = vmatprep.subr.mxu0 0.0
    %204 = vmatpush1.msra.mxu0 %v91
    %205 = vmatprep.subr.mxu0 0.0
    %206 = vmatpush1.msra.mxu0 %v90
    %207 = vmatprep.subr.mxu0 0.0
    %208 = vmatpush1.msra.mxu0 %v89
    %209 = vmatprep.subr.mxu0 0.0
    %210 = vmatpush1.msra.mxu0 %v88
    %211 = vmatprep.subr.mxu0 0.0
    %212 = vmatpush1.msra.mxu0 %v87
    %213 = vmatprep.subr.mxu0 0.0
    %214 = vmatpush1.msra.mxu0 %v86
    %215 = vmatprep.subr.mxu0 0.0
    %216 = vmatpush1.msra.mxu0 %v85
    %217 = vmatprep.subr.mxu0 0.0
    %218 = vmatpush1.msra.mxu0 %v84
    %219 = vmatprep.subr.mxu0 0.0
    %220 = vmatpush2.msra.mxu0 0.0
    %221 = vmatprep.subr.mxu0 0.0
    %222 = vmatpush2.msra.mxu0 0.0
    %223 = vmatprep.subr.mxu0 0.0
    %224 = vmatpush2.msra.mxu0 0.0
    %225 = vmatprep.subr.mxu0 0.0
    %226 = vmatpush2.msra.mxu0 0.0
    %227 = vmatprep.subr.mxu0 0.0
    %228 = vmatpush2.msra.mxu0 0.0
    %229 = vmatprep.subr.mxu0 0.0
    %230 = vmatpush2.msra.mxu0 0.0
    %231 = vmatprep.subr.mxu0 0.0
    %232 = vmatpush2.msra.mxu0 0.0
    %233 = vmatprep.subr.mxu0 0.0
    %234 = vmatpush2.msra.mxu0 0.0
    %235 = vmatprep.subr.mxu0 0.0
    %236 = vmatpush2.msra.mxu0 0.0
    %237 = vmatprep.subr.mxu0 0.0
    %238 = vmatpush2.msra.mxu0 0.0
    %239 = vmatprep.subr.mxu0 0.0
    %240 = vmatpush2.msra.mxu0 0.0
    %241 = vmatprep.subr.mxu0 0.0
    %242 = vmatpush2.msra.mxu0 0.0
    %243 = vmatprep.subr.mxu0 0.0
    %244 = vmatpush2.msra.mxu0 0.0
    %245 = vmatprep.subr.mxu0 0.0
    %246 = vmatpush2.msra.mxu0 0.0
    %247 = vmatprep.subr.mxu0 0.0
    %248 = vmatpush2.msra.mxu0 0.0
    %249 = vmatprep.subr.mxu0 0.0
    %250 = vmatpush2.msra.mxu0 0.0
    %251 = vmatprep.mubr.f32.mxu0 0.0
    %252 = vmatmul.mubr.f32.gmra.mxu0 %v83
    %v253 = vpop.f32.mrf.mxu0
    %v254 = vadd.f32 %v184, %v253
    %v255 = vpop.f32.mrf.mxu0
    %256 = vdwg.mxu0
    %v257 = vld [vmem:[#allocation10] ss:$0 sm:$0xff]
    %v258 = vadd.f32 %v254, %v257
    %v259 = vmax.f32 %v258, 0.0
    %v260 = vld [vmem:[#allocation8] sm:$0xff]
    %v261 = vld [vmem:[#allocation8 + $0x8] sm:$0xff]
    %v262 = vld [vmem:[#allocation8 + $0x10] sm:$0xff]
    %v263 = vld [vmem:[#allocation8 + $0x18] sm:$0xff]
    %v264 = vld [vmem:[#allocation8 + $0x20] sm:$0xff]
    %v265 = vld [vmem:[#allocation8 + $0x28] sm:$0xff]
    %v266 = vld [vmem:[#allocation8 + $0x30] sm:$0xff]
    %v267 = vld [vmem:[#allocation8 + $0x38] sm:$0xff]
    %v268 = vld [vmem:[#allocation8 + $0x40] sm:$0xff]
    %v269 = vld [vmem:[#allocation8 + $0x48] sm:$0xff]
    %v270 = vld [vmem:[#allocation8 + $0x50] sm:$0xff]
    %v271 = vld [vmem:[#allocation8 + $0x58] sm:$0xff]
    %v272 = vld [vmem:[#allocation8 + $0x60] sm:$0xff]
    %v273 = vld [vmem:[#allocation8 + $0x68] sm:$0xff]
    %v274 = vld [vmem:[#allocation8 + $0x70] sm:$0xff]
    %v275 = vld [vmem:[#allocation8 + $0x78] sm:$0xff]
    %v276 = vld [vmem:[#allocation8 + $0x80] sm:$0xff]
    %v277 = vld [vmem:[#allocation8 + $0x88] sm:$0xff]
    %v278 = vld [vmem:[#allocation8 + $0x90] sm:$0xff]
    %v279 = vld [vmem:[#allocation8 + $0x98] sm:$0xff]
    %v280 = vld [vmem:[#allocation8 + $0xa0] sm:$0xff]
    %v281 = vld [vmem:[#allocation8 + $0xa8] sm:$0xff]
    %v282 = vld [vmem:[#allocation8 + $0xb0] sm:$0xff]
    %v283 = vld [vmem:[#allocation8 + $0xb8] sm:$0xff]
    %v284 = vld [vmem:[#allocation8 + $0xc0] sm:$0xff]
    %v285 = vld [vmem:[#allocation8 + $0xc8] sm:$0xff]
    %v286 = vld [vmem:[#allocation8 + $0xd0] sm:$0xff]
    %v287 = vld [vmem:[#allocation8 + $0xd8] sm:$0xff]
    %v288 = vld [vmem:[#allocation8 + $0xe0] sm:$0xff]
    %v289 = vld [vmem:[#allocation8 + $0xe8] sm:$0xff]
    %v290 = vld [vmem:[#allocation8 + $0xf0] sm:$0xff]
    %v291 = vld [vmem:[#allocation8 + $0xf8] sm:$0xff]
    %s292 = scalar_lea.vmem [#allocation10], 1
    %v293 = vld [vmem:[%s292] ss:$8 sm:$0x3]
    %v295 = vlaneseq
    %v296 = vshrl.u32 %v295, 7
    %v297 = vsub.s32 0, %v296
    %v298 = vrot.slane %v293, %v297
    %v299 = vlaneseq
    %v300 = vshrl.u32 %v299, 7
    %v301 = vsub.s32 1, %v300
    %v302 = vrot.slane %v293, %v301
    %305 = vmatprep.subr.mxu0 %v291
    %306 = vmatpush1.msra.mxu0 %v290
    %307 = vmatprep.subr.mxu0 %v289
    %308 = vmatpush1.msra.mxu0 %v288
    %309 = vmatprep.subr.mxu0 %v287
    %310 = vmatpush1.msra.mxu0 %v286
    %311 = vmatprep.subr.mxu0 %v285
    %312 = vmatpush1.msra.mxu0 %v284
    %313 = vmatprep.subr.mxu0 %v283
    %314 = vmatpush1.msra.mxu0 %v282
    %315 = vmatprep.subr.mxu0 %v281
    %316 = vmatpush1.msra.mxu0 %v280
    %317 = vmatprep.subr.mxu0 %v279
    %318 = vmatpush1.msra.mxu0 %v278
    %319 = vmatprep.subr.mxu0 %v277
    %320 = vmatpush1.msra.mxu0 %v276
    %321 = vmatprep.subr.mxu0 %v275
    %322 = vmatpush1.msra.mxu0 %v274
    %323 = vmatprep.subr.mxu0 %v273
    %324 = vmatpush1.msra.mxu0 %v272
    %325 = vmatprep.subr.mxu0 %v271
    %326 = vmatpush1.msra.mxu0 %v270
    %327 = vmatprep.subr.mxu0 %v269
    %328 = vmatpush1.msra.mxu0 %v268
    %329 = vmatprep.subr.mxu0 %v267
    %330 = vmatpush1.msra.mxu0 %v266
    %331 = vmatprep.subr.mxu0 %v265
    %332 = vmatpush1.msra.mxu0 %v264
    %333 = vmatprep.subr.mxu0 %v263
    %334 = vmatpush1.msra.mxu0 %v262
    %335 = vmatprep.subr.mxu0 %v261
    %336 = vmatpush1.msra.mxu0 %v260
    %337 = vmatprep.subr.mxu0 0.0
    %338 = vmatpush2.msra.mxu0 0.0
    %339 = vmatprep.subr.mxu0 0.0
    %340 = vmatpush2.msra.mxu0 0.0
    %341 = vmatprep.subr.mxu0 0.0
    %342 = vmatpush2.msra.mxu0 0.0
    %343 = vmatprep.subr.mxu0 0.0
    %344 = vmatpush2.msra.mxu0 0.0
    %345 = vmatprep.subr.mxu0 0.0
    %346 = vmatpush2.msra.mxu0 0.0
    %347 = vmatprep.subr.mxu0 0.0
    %348 = vmatpush2.msra.mxu0 0.0
    %349 = vmatprep.subr.mxu0 0.0
    %350 = vmatpush2.msra.mxu0 0.0
    %351 = vmatprep.subr.mxu0 0.0
    %352 = vmatpush2.msra.mxu0 0.0
    %353 = vmatprep.subr.mxu0 0.0
    %354 = vmatpush2.msra.mxu0 0.0
    %355 = vmatprep.subr.mxu0 0.0
    %356 = vmatpush2.msra.mxu0 0.0
    %357 = vmatprep.subr.mxu0 0.0
    %358 = vmatpush2.msra.mxu0 0.0
    %359 = vmatprep.subr.mxu0 0.0
    %360 = vmatpush2.msra.mxu0 0.0
    %361 = vmatprep.subr.mxu0 0.0
    %362 = vmatpush2.msra.mxu0 0.0
    %363 = vmatprep.subr.mxu0 0.0
    %364 = vmatpush2.msra.mxu0 0.0
    %365 = vmatprep.subr.mxu0 0.0
    %366 = vmatpush2.msra.mxu0 0.0
    %367 = vmatprep.subr.mxu0 0.0
    %368 = vmatpush2.msra.mxu0 0.0
    %369 = vmatprep.mubr.f32.mxu0 0.0
    %370 = vmatmul.mubr.f32.gmra.mxu0 %v259
    %v371 = vpop.f32.mrf.mxu0
    %v372 = vadd.f32 %v298, %v371
    %v373 = vpop.f32.mrf.mxu0
    %v374 = vadd.f32 %v302, %v373
    %375 = vdwg.mxu0
    %376 = vst [vmem:[#allocation11] sm:$0xff] %v372
    %377 = vst [vmem:[#allocation11 + $0x8] sm:$0xff] %v374
    // Predicated region
    $region42: #{tpu_custom_call.1} parent=1 // pred_check
      _
    $region43: #{tpu_custom_call.1} parent=1 // pred_check_branch
      %379 = sbr.rel (0) target = $region45
    $region44: #{tpu_custom_call.1} parent=1 // pred_region
      %s381 = ssub.s32 256, 256
      %382 = vsyncadd [#allocation4], %s381
      %s384 = sshll.u32 [#allocation11], 4
      %s385 = int_to_ptr.vmem [resolvable:$true] %s384
      %387 = dma.vmem_to_hbm [thread:$0]  %s385, 256, %s5, [#allocation4]
    $region45: #{tpu_custom_call.1} parent=1 // pred_fallthru
      _
    // Predicated region
    $region46: #{tpu_custom_call.1} parent=1 // pred_check
      _
    $region47: #{tpu_custom_call.1} parent=1 // pred_check_branch
      %389 = sbr.rel (0) target = $region49
    $region48: #{tpu_custom_call.1} parent=1 // pred_region
      %390 = dma.done [#allocation4], 256
    $region49: #{tpu_custom_call.1} parent=1 // pred_fallthru
      _
    %391 = vsyncpa [#allocation3], 1
    %392 = vsyncpa [#allocation6], 1
    %393 = vsyncpa [#allocation9], 1
    %394 = vsyncpa [#allocation4], 1

</llo_original>
